<compile_context>
chip_gen: v6e
topology: v6e:2x2x1
jax: 0.10.0
libtpu: 0.0.40
codegen_flags: <defaults>
</compile_context>

<pallas_src>
import functools

import jax
import jax.numpy as jnp
from jax.experimental import pallas as pl
from jax.experimental.pallas import tpu as pltpu

_LOG_CLAMP = -100.0          # PyTorch F.binary_cross_entropy clamps log() at -100
_LANE = 128
_NUM_SHARDS = 2              # partial-sum shards; uses both TCs on v7x, harmless elsewhere
_MAX_BLOCK_ROWS = 8192       # 8192*128*4B = 4 MiB per f32 input tile
_CHUNK_ROWS = 1024           # per-chunk compute inside a tile (512 KiB f32 live data)
_VMEM_LIMIT_BYTES = 40 * 1024 * 1024  # buffers (16 MiB) + chunk scratch, < v7x 64 MiB


def _focal_bce_kernel(x_ref, t_ref, o_ref, *, block_rows, chunk_rows,
                      steps_per_shard, total_blocks, valid_rows_last):
    c = pl.program_id(0)     # partial-sum shard ("parallel")
    i = pl.program_id(1)     # reduction step within the shard ("arbitrary")
    blk = c * steps_per_shard + i

    # Output block index is constant in i, so o_ref stays VMEM-resident across
    # the reduction axis and acts as the accumulator.
    @pl.when(i == 0)
    def _init():
        o_ref[...] = jnp.zeros_like(o_ref)

    n_chunks = block_rows // chunk_rows
    mask_last = valid_rows_last < block_rows
    interior_limit = total_blocks - 1 if mask_last else total_blocks

    def chunk_sum(ci, masked):
        r0 = ci * chunk_rows
        if not isinstance(r0, int):
            r0 = pl.multiple_of(r0, chunk_rows)
        p = x_ref[pl.ds(r0, chunk_rows), :].astype(jnp.float32)
        t = t_ref[pl.ds(r0, chunk_rows), :].astype(jnp.float32)
        log_p = jnp.maximum(jnp.log(p), _LOG_CLAMP)
        log_1mp = jnp.maximum(jnp.log(1.0 - p), _LOG_CLAMP)
        bce = -(t * log_p + (1.0 - t) * log_1mp)
        if masked:
            # Row-level mask for the final (partial / clamped-DMA) block only.
            # jnp.where lowers to a true select, so NaN/Inf from log() of
            # garbage rows never propagates.  Do NOT replace with mask-multiply.
            row = r0 + jax.lax.broadcasted_iota(jnp.int32, (chunk_rows, _LANE), 0)
            bce = jnp.where(row < valid_rows_last, bce, 0.0)
        # (chunk_rows,128) -> (8,128): tile-aligned reshape + pure VPU adds.
        return bce.reshape(chunk_rows // 8, 8, _LANE).sum(axis=0)

    def block_sum(masked):
        if n_chunks == 1:
            return chunk_sum(0, masked)
        return jax.lax.fori_loop(
            0, n_chunks,
            lambda ci, acc: acc + chunk_sum(ci, masked),
            jnp.zeros((8, _LANE), jnp.float32),
            unroll=True)

    # Interior blocks: no masking at all (pure BCE + accumulate, DMA-bound).
    @pl.when(blk < interior_limit)
    def _interior():
        o_ref[...] += block_sum(masked=False)

    if mask_last:
        # Only the final block carries padded / unspecified rows.
        @pl.when(blk == total_blocks - 1)
        def _last():
            o_ref[...] += block_sum(masked=True)
    # blk >= total_blocks (clamped-index steps from the shard split) skip both
    # branches, so the clamped DMA data never contributes.


def _bce_sum_jax(p, t):
    """Plain-JAX BCE *sum* (used only for the <128-element lane tail)."""
    p = p.astype(jnp.float32)
    t = t.astype(jnp.float32)
    log_p = jnp.maximum(jnp.log(p), _LOG_CLAMP)
    log_1mp = jnp.maximum(jnp.log(1.0 - p), _LOG_CLAMP)
    return jnp.sum(-(t * log_p + (1.0 - t) * log_1mp))


def _round_up(x, m):
    return ((x + m - 1) // m) * m


def focal_loss(inputs, targets, alpha=0.8, gamma=2, smooth=1):
    """Pallas TPU implementation of FocalLoss.forward. Returns a scalar f32."""
    del smooth  # unused by the reference forward pass
    x = inputs.reshape(-1)
    t = targets.reshape(-1)
    # Non-float targets (bool / int) are cast once here; float targets
    # (f32 / bf16) stream through the kernel in their native width.
    if not jnp.issubdtype(x.dtype, jnp.floating):
        x = x.astype(jnp.float32)
    if not jnp.issubdtype(t.dtype, jnp.floating):
        t = t.astype(jnp.float32)

    n = x.shape[0]
    n_main = (n // _LANE) * _LANE   # 128-aligned bulk handled by the kernel
    rows = n_main // _LANE

    bce_sum = jnp.float32(0.0)

    if rows > 0:
        if n_main == n:
            x2 = x.reshape(rows, _LANE)      # free, lane-dense view
            t2 = t.reshape(rows, _LANE)
        else:
            x2 = x[:n_main].reshape(rows, _LANE)
            t2 = t[:n_main].reshape(rows, _LANE)

        # Sublane rounding granularity by dtype (f32:8, bf16:16, i8/fp8:32).
        min_sub = 8
        for a in (x2, t2):
            if a.dtype.itemsize == 2:
                min_sub = max(min_sub, 16)
            elif a.dtype.itemsize == 1:
                min_sub = max(min_sub, 32)

        if rows >= _MAX_BLOCK_ROWS:
            block_rows = _MAX_BLOCK_ROWS
            chunk_rows = _CHUNK_ROWS
        else:
            block_rows = _round_up(rows, min_sub)
            chunk_rows = block_rows

        total_blocks = pl.cdiv(rows, block_rows)
        steps_per_shard = pl.cdiv(total_blocks, _NUM_SHARDS)
        valid_rows_last = rows - (total_blocks - 1) * block_rows

        def in_index_map(c, i):
            blk = c * steps_per_shard + i
            # Clamp so no DMA targets a block past the array end; the kernel
            # skips accumulation for clamped steps.
            return (jnp.minimum(blk, total_blocks - 1), 0)

        kernel = functools.partial(
            _focal_bce_kernel,
            block_rows=block_rows,
            chunk_rows=chunk_rows,
            steps_per_shard=steps_per_shard,
            total_blocks=total_blocks,
            valid_rows_last=valid_rows_last,
        )

        partials = pl.pallas_call(
            kernel,
            out_shape=jax.ShapeDtypeStruct((_NUM_SHARDS, 8, _LANE), jnp.float32),
            grid_spec=pltpu.PrefetchScalarGridSpec(
                num_scalar_prefetch=0,
                grid=(_NUM_SHARDS, steps_per_shard),
                in_specs=[
                    pl.BlockSpec((block_rows, _LANE), in_index_map),
                    pl.BlockSpec((block_rows, _LANE), in_index_map),
                ],
                out_specs=pl.BlockSpec((None, 8, _LANE), lambda c, i: (c, 0, 0)),
            ),
            compiler_params=pltpu.CompilerParams(
                dimension_semantics=("parallel", "arbitrary"),
                vmem_limit_bytes=_VMEM_LIMIT_BYTES,
            ),
        )(x2, t2)

        bce_sum = bce_sum + jnp.sum(partials)

    if n_main < n:
        # <128-element ragged lane tail: negligible, handled in plain JAX.
        bce_sum = bce_sum + _bce_sum_jax(x[n_main:], t[n_main:])

    # Scalar focal epilogue (XLA handles it for free).
    bce = bce_sum / jnp.float32(n)
    bce_exp = jnp.exp(-bce)
    return jnp.float32(alpha) * (1.0 - bce_exp) ** jnp.float32(gamma) * bce


def focal_loss_ref(inputs, targets, alpha=0.8, gamma=2, smooth=1):
    """Pure-JAX reference matching the PyTorch module."""
    p = inputs.reshape(-1).astype(jnp.float32)
    t = targets.reshape(-1).astype(jnp.float32)
    log_p = jnp.maximum(jnp.log(p), _LOG_CLAMP)
    log_1mp = jnp.maximum(jnp.log(1.0 - p), _LOG_CLAMP)
    bce = jnp.mean(-(t * log_p + (1.0 - t) * log_1mp))
    bce_exp = jnp.exp(-bce)
    return alpha * (1.0 - bce_exp) ** gamma * bce


if __name__ == "__main__":
    key = jax.random.PRNGKey(0)
    keys = jax.random.split(key, 8)

    # 1) NCHW probabilities + binary targets (lane-aligned case).
    B, C, H, W = 2, 4, 16, 16
    inputs = jax.random.uniform(keys[0], (B, C, H, W), jnp.float32, 0.01, 0.99)
    targets = (jax.random.uniform(keys[1], (B, C, H, W)) > 0.5).astype(jnp.float32)
    out = jax.block_until_ready(focal_loss(inputs, targets))
    ref = focal_loss_ref(inputs, targets)
    assert jnp.allclose(out, ref, rtol=2e-5, atol=1e-6), (out, ref)

    # 2) Ragged size (n % 128 != 0): exercises last-block row mask + lane tail.
    inputs2 = jax.random.uniform(keys[2], (2, 3, 17, 16), jnp.float32, 0.01, 0.99)
    targets2 = (jax.random.uniform(keys[3], (2, 3, 17, 16)) > 0.5).astype(jnp.float32)
    out2 = jax.block_until_ready(focal_loss(inputs2, targets2))
    ref2 = focal_loss_ref(inputs2, targets2)
    assert jnp.allclose(out2, ref2, rtol=2e-5, atol=1e-6), (out2, ref2)

    # 3) Tiny input (n < 128): kernel bypassed, plain-JAX tail only.
    inputs3 = jax.random.uniform(keys[4], (3, 20), jnp.float32, 0.01, 0.99)
    targets3 = (jax.random.uniform(keys[5], (3, 20)) > 0.5).astype(jnp.float32)
    out3 = jax.block_until_ready(focal_loss(inputs3, targets3))
    ref3 = focal_loss_ref(inputs3, targets3)
    assert jnp.allclose(out3, ref3, rtol=2e-5, atol=1e-6), (out3, ref3)

    # 4) Larger input: exercises multi-block grid, both shards and the chunked
    #    unrolled accumulation path.
    inputs4 = jax.random.uniform(keys[6], (2, 16, 256, 256), jnp.float32, 0.01, 0.99)
    targets4 = (jax.random.uniform(keys[7], (2, 16, 256, 256)) > 0.5).astype(jnp.float32)
    out4 = jax.block_until_ready(focal_loss(inputs4, targets4))
    ref4 = focal_loss_ref(inputs4, targets4)
    assert jnp.allclose(out4, ref4, rtol=1e-4, atol=1e-6), (out4, ref4)

    print("KERNEL_OK")
</pallas_src>

<mosaic_0001>
module attributes {stable_mosaic.version = 11 : i64} {
  func.func @_focal_bce_kernel(%arg0: i32, %arg1: i32, %arg2: memref<16x128xf32, #tpu.memory_space<vmem>>, %arg3: memref<16x128xf32, #tpu.memory_space<vmem>>, %arg4: memref<1x8x128xf32, #tpu.memory_space<vmem>>) attributes {dimension_semantics = [#tpu.dimension_semantics<parallel>, #tpu.dimension_semantics<arbitrary>], iteration_bounds = array<i64: 2, 1>, scalar_prefetch = 0 : i64, scratch_operands = 0 : i64, tpu.core_type = #tpu.core_type<tc>, window_params = [{transform_indices = @transform_0, window_bounds = array<i64: 16, 128>}, {transform_indices = @transform_1, window_bounds = array<i64: 16, 128>}, {transform_indices = @transform_2, window_bounds = array<i64: 1, 8, 128>}]} {
    %c1_i32 = arith.constant 1 : i32
    %0 = arith.muli %arg0, %c1_i32 : i32
    %1 = arith.addi %0, %arg1 : i32
    %c0_i32 = arith.constant 0 : i32
    %2 = arith.cmpi eq, %arg1, %c0_i32 : i32
    %3 = arith.extui %2 : i1 to i32
    %c0_i32_0 = arith.constant 0 : i32
    %4 = arith.cmpi ne, %3, %c0_i32_0 : i32
    scf.if %4 {
      %cst = arith.constant 0.000000e+00 : f32
      %8 = vector.broadcast %cst : f32 to vector<8x128xf32>
      %c0 = arith.constant 0 : index
      %c0_3 = arith.constant 0 : index
      %c0_4 = arith.constant 0 : index
      %9 = vector.load %arg4[%c0, %c0_3, %c0_4] : memref<1x8x128xf32, #tpu.memory_space<vmem>>, vector<1x8x128xf32>
      %10 = vector.shape_cast %9 : vector<1x8x128xf32> to vector<8x128xf32>
      %11 = vector.shape_cast %8 : vector<8x128xf32> to vector<1x8x128xf32>
      tpu.vector_store %arg4[%c0, %c0_3, %c0_4], %11 {strides = array<i32>} : memref<1x8x128xf32, #tpu.memory_space<vmem>>, vector<1x8x128xf32>,
    } else {
    }
    %c1_i32_1 = arith.constant 1 : i32
    %5 = arith.cmpi slt, %1, %c1_i32_1 : i32
    %6 = arith.extui %5 : i1 to i32
    %c0_i32_2 = arith.constant 0 : i32
    %7 = arith.cmpi ne, %6, %c0_i32_2 : i32
    scf.if %7 {
      %c0 = arith.constant 0 : index
      %c0_3 = arith.constant 0 : index
      %c0_4 = arith.constant 0 : index
      %8 = vector.load %arg4[%c0, %c0_3, %c0_4] : memref<1x8x128xf32, #tpu.memory_space<vmem>>, vector<1x8x128xf32>
      %9 = vector.shape_cast %8 : vector<1x8x128xf32> to vector<8x128xf32>
      %c0_5 = arith.constant 0 : index
      %c0_6 = arith.constant 0 : index
      %10 = vector.load %arg2[%c0_5, %c0_6] : memref<16x128xf32, #tpu.memory_space<vmem>>, vector<16x128xf32>
      %c0_7 = arith.constant 0 : index
      %c0_8 = arith.constant 0 : index
      %11 = vector.load %arg3[%c0_7, %c0_8] : memref<16x128xf32, #tpu.memory_space<vmem>>, vector<16x128xf32>
      %12 = math.log %10 : vector<16x128xf32>
      %cst = arith.constant -1.000000e+02 : f32
      %13 = vector.broadcast %cst : f32 to vector<16x128xf32>
      %14 = arith.maximumf %12, %13 : vector<16x128xf32>
      %cst_9 = arith.constant 1.000000e+00 : f32
      %15 = vector.broadcast %cst_9 : f32 to vector<16x128xf32>
      %16 = arith.subf %15, %10 : vector<16x128xf32>
      %17 = math.log %16 : vector<16x128xf32>
      %cst_10 = arith.constant -1.000000e+02 : f32
      %18 = vector.broadcast %cst_10 : f32 to vector<16x128xf32>
      %19 = arith.maximumf %17, %18 : vector<16x128xf32>
      %20 = arith.mulf %11, %14 : vector<16x128xf32>
      %cst_11 = arith.constant 1.000000e+00 : f32
      %21 = vector.broadcast %cst_11 : f32 to vector<16x128xf32>
      %22 = arith.subf %21, %11 : vector<16x128xf32>
      %23 = arith.mulf %22, %19 : vector<16x128xf32>
      %24 = arith.addf %20, %23 : vector<16x128xf32>
      %cst_12 = arith.constant 0.000000e+00 : f32
      %25 = vector.broadcast %cst_12 : f32 to vector<16x128xf32>
      %26 = arith.subf %25, %24 : vector<16x128xf32>
      %27 = vector.shape_cast %26 : vector<16x128xf32> to vector<2x8x128xf32>
      %cst_13 = arith.constant dense<0.000000e+00> : vector<8x128xf32>
      %28 = vector.multi_reduction <add>, %27, %cst_13 [0] : vector<2x8x128xf32> to vector<8x128xf32>
      %29 = arith.addf %9, %28 : vector<8x128xf32>
      %c0_14 = arith.constant 0 : index
      %c0_15 = arith.constant 0 : index
      %c0_16 = arith.constant 0 : index
      %30 = vector.load %arg4[%c0_14, %c0_15, %c0_16] : memref<1x8x128xf32, #tpu.memory_space<vmem>>, vector<1x8x128xf32>
      %31 = vector.shape_cast %30 : vector<1x8x128xf32> to vector<8x128xf32>
      %32 = vector.shape_cast %29 : vector<8x128xf32> to vector<1x8x128xf32>
      tpu.vector_store %arg4[%c0_14, %c0_15, %c0_16], %32 {strides = array<i32>} : memref<1x8x128xf32, #tpu.memory_space<vmem>>, vector<1x8x128xf32>,
    } else {
    }
    return
  }
  func.func @transform_0(%arg0: i32, %arg1: i32) -> (i32, i32) {
    %c1_i32 = arith.constant 1 : i32
    %0 = arith.muli %arg0, %c1_i32 : i32
    %1 = arith.addi %0, %arg1 : i32
    %c0_i32 = arith.constant 0 : i32
    %2 = arith.minsi %1, %c0_i32 : i32
    %c0_i32_0 = arith.constant 0 : i32
    %c0_i32_1 = arith.constant 0 : i32
    return %2, %c0_i32_0 : i32, i32
  }
  func.func @transform_1(%arg0: i32, %arg1: i32) -> (i32, i32) {
    %c1_i32 = arith.constant 1 : i32
    %0 = arith.muli %arg0, %c1_i32 : i32
    %1 = arith.addi %0, %arg1 : i32
    %c0_i32 = arith.constant 0 : i32
    %2 = arith.minsi %1, %c0_i32 : i32
    %c0_i32_0 = arith.constant 0 : i32
    %c0_i32_1 = arith.constant 0 : i32
    return %2, %c0_i32_0 : i32, i32
  }
  func.func @transform_2(%arg0: i32, %arg1: i32) -> (i32, i32, i32) {
    %c0_i32 = arith.constant 0 : i32
    %c0_i32_0 = arith.constant 0 : i32
    %c0_i32_1 = arith.constant 0 : i32
    return %arg0, %c0_i32, %c0_i32_0 : i32, i32, i32
  }
}

</mosaic_0001>

<llo_original>
// kernel: tpu_custom_call.1
$region0: #{tpu_custom_call.1}
  #allocation0 [shape = 'u32[]', space=smem, size = 0x4, offset = 0x4, fixed_abs, tag = 'smem constant byte address 0x4 - core index']
  #allocation1 [shape = 'u32[144,128]{1,0:T(1,128)}', space=vmem, size = 0x12000, scoped, tag = 'internal scratch']
  %s0 = inlined_call_operand.hbm [shape: f32[16,128], index: 0, kind: input, shape index: {}]
  %s1 = inlined_call_operand.hbm [shape: f32[16,128], index: 1, kind: input, shape index: {}]
  %s2 = inlined_call_operand.hbm [shape: f32[2,8,128], index: 2, kind: output, shape index: {}]
  %s3 = sld [smem:[#allocation0]]
  $region57: #{tpu_custom_call.1} parent=0
    _
  %s5 = ssub.s32 1, %s3
  %s6 = scalar_select 0, %s5, %s3
  $region1: #{tpu_custom_call.1} parent=0
    #allocation2 [shape = 'u8[16384]{0}', space=vmem, size = 0x4000, scoped, tag = 'input window, operand 0']
    #allocation3 [shape = 's32[2]{0}', space=sflag, size = 0x8, scoped, tag = 'scoped memory for tpu_custom_call.1']
    #allocation4 [shape = 's32[2]{0}', space=sflag, size = 0x8, scoped, tag = 'scoped memory for tpu_custom_call.1']
    #allocation5 [shape = 'u8[16384]{0}', space=vmem, size = 0x4000, scoped, tag = 'input window, operand 1']
    #allocation6 [shape = 's32[2]{0}', space=sflag, size = 0x8, scoped, tag = 'scoped memory for tpu_custom_call.1']
    #allocation7 [shape = 'u8[8192]{0}', space=vmem, size = 0x2000, scoped, tag = 'output window, operand 0']
    %7 = vsyncpa [#allocation3], 0
    %s8 = scalar_lea.sflag [#allocation3], 1
    %9 = vsyncpa %s8, 0
    %10 = vsyncpa [#allocation6], 0
    %s11 = scalar_lea.sflag [#allocation6], 1
    %12 = vsyncpa %s11, 0
    %13 = vsyncpa [#allocation4], 0
    %s14 = scalar_lea.sflag [#allocation4], 1
    %15 = vsyncpa %s14, 0
    loop: start=0, step=1, limit=4
    $region2: #{tpu_custom_call.1} parent=1 // loop_pre_header
      _
    $region3: #{tpu_custom_call.1} parent=1 // loop_header
      %s17 = sphi 0, %s21
      %p18 = scmp.ge.s32.totalorder %s17, 4
      %s24 = sphi 0, %s36
      %s25 = sphi 0, %s32
      %s26 = sphi 0, %s24
      %s27 = sphi 0, %s25
      %s28 = sphi 0, %s26
      %s29 = sphi 0, %s27
      %s45 = sphi 0, %s47
      %s48 = sphi 0, %s45
      %s49 = sphi 0, %s48
      %s65 = sphi 0, %s49
      %s77 = sphi 0, %s79
      %s80 = sphi 0, %s77
      %s81 = sphi 0, %s80
      %s97 = sphi 0, %s81
      %s103 = sphi 0, %s105
      %s106 = sphi 0, %s103
      %s107 = sphi 0, %s106
      %s123 = sphi 0, %s107
    $region4: #{tpu_custom_call.1} parent=1 // loop_header_branch
      %20 = sbr.rel (%p18) target = $region8
    $region5: #{tpu_custom_call.1} parent=1 // loop_body
      %s22 = ssub.s32 %s17, 1
      %s23 = ssub.s32 %s17, 2
      %s30 = sadd.s32 1, %s25
      %p31 = scmp.ge.s32.totalorder %s30, 1
      %s32 = scalar_select %p31, 0, %s30
      %s33 = sadd.s32 1, %s24
      %s34 = scalar_select %p31, %s33, %s24
      %p35 = scmp.ge.s32.totalorder %s34, 2
      %s36 = scalar_select %p35, 0, %s34
      %s37 = sadd.s32 %s24, %s25
      %p38 = scmp.lt.s32.totalorder %s37, 0
      %s39 = scalar_select %p38, %s37, 0
      %s40 = sadd.s32 %s36, %s32
      %p41 = scmp.lt.s32.totalorder %s40, 0
      %s42 = scalar_select %p41, %s40, 0
      %s43 = ssub.s32 %s39, %s42
      %p44 = scmp.eq.s32.totalorder %s43, 0
      %s46 = sadd.s32 %s45, 1
      %s47 = scalar_select %p44, %s45, %s46
      %p50 = pneg %p44
      %p51 = scmp.eq.s32.totalorder %s17, 1
      %p52 = por %p50, %p51
      %p53 = scmp.ne.s32.totalorder %s45, %s48
      %p54 = scmp.eq.s32.totalorder %s17, 0
      %p55 = por %p53, %p54
      %p56 = scmp.ne.s32.totalorder %s45, %s48
      %p57 = scmp.eq.s32.totalorder %s22, 1
      %p58 = por %p56, %p57
      %p59 = scmp.ne.s32.totalorder %s48, %s49
      %p60 = scmp.eq.s32.totalorder %s22, 0
      %p61 = por %p59, %p60
      %p62 = scmp.ne.s32.totalorder %s48, %s49
      %p63 = scmp.eq.s32.totalorder %s23, 1
      %p64 = por %p62, %p63
      %p66 = scmp.ne.s32.totalorder %s49, %s65
      %p67 = scmp.eq.s32.totalorder %s23, 0
      %p68 = por %p66, %p67
      %s69 = sadd.s32 %s24, %s25
      %p70 = scmp.lt.s32.totalorder %s69, 0
      %s71 = scalar_select %p70, %s69, 0
      %s72 = sadd.s32 %s36, %s32
      %p73 = scmp.lt.s32.totalorder %s72, 0
      %s74 = scalar_select %p73, %s72, 0
      %s75 = ssub.s32 %s71, %s74
      %p76 = scmp.eq.s32.totalorder %s75, 0
      %s78 = sadd.s32 %s77, 1
      %s79 = scalar_select %p76, %s77, %s78
      %p82 = pneg %p76
      %p83 = scmp.eq.s32.totalorder %s17, 1
      %p84 = por %p82, %p83
      %p85 = scmp.ne.s32.totalorder %s77, %s80
      %p86 = scmp.eq.s32.totalorder %s17, 0
      %p87 = por %p85, %p86
      %p88 = scmp.ne.s32.totalorder %s77, %s80
      %p89 = scmp.eq.s32.totalorder %s22, 1
      %p90 = por %p88, %p89
      %p91 = scmp.ne.s32.totalorder %s80, %s81
      %p92 = scmp.eq.s32.totalorder %s22, 0
      %p93 = por %p91, %p92
      %p94 = scmp.ne.s32.totalorder %s80, %s81
      %p95 = scmp.eq.s32.totalorder %s23, 1
      %p96 = por %p94, %p95
      %p98 = scmp.ne.s32.totalorder %s81, %s97
      %p99 = scmp.eq.s32.totalorder %s23, 0
      %p100 = por %p98, %p99
      %s101 = ssub.s32 %s24, %s36
      %p102 = scmp.eq.s32.totalorder %s101, 0
      %s104 = sadd.s32 %s103, 1
      %s105 = scalar_select %p102, %s103, %s104
      %p108 = pneg %p102
      %p109 = scmp.eq.s32.totalorder %s17, 1
      %p110 = por %p108, %p109
      %p111 = scmp.ne.s32.totalorder %s103, %s106
      %p112 = scmp.eq.s32.totalorder %s17, 0
      %p113 = por %p111, %p112
      %p114 = scmp.ne.s32.totalorder %s103, %s106
      %p115 = scmp.eq.s32.totalorder %s22, 1
      %p116 = por %p114, %p115
      %p117 = scmp.ne.s32.totalorder %s106, %s107
      %p118 = scmp.eq.s32.totalorder %s22, 0
      %p119 = por %p117, %p118
      %p120 = scmp.ne.s32.totalorder %s106, %s107
      %p121 = scmp.eq.s32.totalorder %s23, 1
      %p122 = por %p120, %p121
      %p124 = scmp.ne.s32.totalorder %s107, %s123
      %p125 = scmp.eq.s32.totalorder %s23, 0
      %p126 = por %p124, %p125
      %p127 = scmp.le.s32.totalorder 1, %s17
      %p128 = scmp.lt.s32.totalorder %s17, 3
      %p129 = pnand %p127, %p128
      %p130 = pneg %p129
      // Predicated region
      $region9: #{tpu_custom_call.1} parent=5 // pred_check
        _
      $region10: #{tpu_custom_call.1} parent=5 // pred_check_branch
        %132 = sbr.rel (%p129) target = $region12
      $region11: #{tpu_custom_call.1} parent=5 // pred_region
        %s133 = ssub.s32 %s17, 1
      $region12: #{tpu_custom_call.1} parent=5 // pred_fallthru
        _
      %p134 = scmp.lt.s32.totalorder %s17, 2
      // Predicated region
      $region13: #{tpu_custom_call.1} parent=5 // pred_check
        %p135 = pneg %p134
      $region14: #{tpu_custom_call.1} parent=5 // pred_check_branch
        %137 = sbr.rel (%p135) target = $region16
      $region15: #{tpu_custom_call.1} parent=5 // pred_region
        // Predicated region
        $region17: #{tpu_custom_call.1} parent=15 // pred_check
          %p138 = pneg %p55
        $region18: #{tpu_custom_call.1} parent=15 // pred_check_branch
          %140 = sbr.rel (%p138) target = $region20
        $region19: #{tpu_custom_call.1} parent=15 // pred_region
          %s141 = sand.u32 %s45, 1
          %s142 = scalar_lea.sflag [#allocation3], %s141
          %s143 = sand.u32 %s45, 1
          %s144 = smul.addr %s143, 16
          %s145 = scalar_lea.vmem [#allocation2], %s144
          %s146 = sadd.s32 %s24, %s25
          %p147 = scmp.lt.s32.totalorder %s146, 0
          %s148 = scalar_select %p147, %s146, 0
          %s149 = smul.u32 2, %s148
          %s151 = ssub.s32 256, 256
          %152 = vsyncadd %s142, %s151
          %s153 = smul.addr %s149, 128
          %s154 = scalar_lea.hbm %s0, %s153
          %s155 = sshll.u32 %s145, 4
          %s156 = int_to_ptr.vmem [resolvable:$true] %s155
          %161 = dma.hbm_to_vmem [thread:$0]  %s154, 256, %s156, %s142, 128, 128, 8
        $region20: #{tpu_custom_call.1} parent=15 // pred_fallthru
          _
        // Predicated region
        $region21: #{tpu_custom_call.1} parent=15 // pred_check
          %p162 = pneg %p87
        $region22: #{tpu_custom_call.1} parent=15 // pred_check_branch
          %164 = sbr.rel (%p162) target = $region24
        $region23: #{tpu_custom_call.1} parent=15 // pred_region
          %s165 = sand.u32 %s77, 1
          %s166 = scalar_lea.sflag [#allocation6], %s165
          %s167 = sand.u32 %s77, 1
          %s168 = smul.addr %s167, 16
          %s169 = scalar_lea.vmem [#allocation5], %s168
          %s170 = sadd.s32 %s24, %s25
          %p171 = scmp.lt.s32.totalorder %s170, 0
          %s172 = scalar_select %p171, %s170, 0
          %s173 = smul.u32 2, %s172
          %s175 = ssub.s32 256, 256
          %176 = vsyncadd %s166, %s175
          %s177 = smul.addr %s173, 128
          %s178 = scalar_lea.hbm %s1, %s177
          %s179 = sshll.u32 %s169, 4
          %s180 = int_to_ptr.vmem [resolvable:$true] %s179
          %185 = dma.hbm_to_vmem [thread:$0]  %s178, 256, %s180, %s166, 128, 128, 8
        $region24: #{tpu_custom_call.1} parent=15 // pred_fallthru
          _
      $region16: #{tpu_custom_call.1} parent=5 // pred_fallthru
        _
      %p186 = scmp.le.s32.totalorder 1, %s17
      %p187 = scmp.lt.s32.totalorder %s17, 3
      %p188 = pnand %p186, %p187
      %p189 = pneg %p188
      // Predicated region
      $region25: #{tpu_custom_call.1} parent=5 // pred_check
        _
      $region26: #{tpu_custom_call.1} parent=5 // pred_check_branch
        %191 = sbr.rel (%p188) target = $region28
      $region27: #{tpu_custom_call.1} parent=5 // pred_region
        %s192 = ssub.s32 %s17, 1
        %s193 = sand.u32 %s48, 1
        %s194 = scalar_lea.sflag [#allocation3], %s193
        %s195 = sand.u32 %s48, 1
        %s196 = smul.addr %s195, 16
        %s197 = scalar_lea.vmem [#allocation2], %s196
        // Predicated region
        $region29: #{tpu_custom_call.1} parent=27 // pred_check
          %p198 = pneg %p61
        $region30: #{tpu_custom_call.1} parent=27 // pred_check_branch
          %200 = sbr.rel (%p198) target = $region32
        $region31: #{tpu_custom_call.1} parent=27 // pred_region
          %201 = dma.done %s194, 256
        $region32: #{tpu_custom_call.1} parent=27 // pred_fallthru
          _
        %s202 = sand.u32 %s80, 1
        %s203 = scalar_lea.sflag [#allocation6], %s202
        %s204 = sand.u32 %s80, 1
        %s205 = smul.addr %s204, 16
        %s206 = scalar_lea.vmem [#allocation5], %s205
        // Predicated region
        $region33: #{tpu_custom_call.1} parent=27 // pred_check
          %p207 = pneg %p93
        $region34: #{tpu_custom_call.1} parent=27 // pred_check_branch
          %209 = sbr.rel (%p207) target = $region36
        $region35: #{tpu_custom_call.1} parent=27 // pred_region
          %210 = dma.done %s203, 256
        $region36: #{tpu_custom_call.1} parent=27 // pred_fallthru
          _
        %s211 = sand.u32 %s48, 1
        %s212 = scalar_lea.sflag [#allocation3], %s211
        %s213 = sand.u32 %s48, 1
        %s214 = smul.addr %s213, 16
        %s215 = scalar_lea.vmem [#allocation2], %s214
        %p216 = pneg %p61
        %p217 = pneg %p58
        %s218 = sand.u32 %s80, 1
        %s219 = scalar_lea.sflag [#allocation6], %s218
        %s220 = sand.u32 %s80, 1
        %s221 = smul.addr %s220, 16
        %s222 = scalar_lea.vmem [#allocation5], %s221
        %p223 = pneg %p93
        %p224 = pneg %p90
        %p225 = pneg %p119
        %p226 = pneg %p116
        %s227 = sand.u32 %s106, 1
        %s228 = scalar_lea.sflag [#allocation4], %s227
        %s229 = sand.u32 %s106, 1
        %s230 = smul.addr %s229, 8
        %s231 = scalar_lea.vmem [#allocation7], %s230
        %s232 = sadd.s32 %s26, %s27
        %p233 = scmp.lt.s32.totalorder %s232, 0
        %s234 = scalar_select %p233, %s232, 0
        %s235 = smul.u32 2, %s234
        %s236 = sadd.s32 %s26, %s27
        %p237 = scmp.lt.s32.totalorder %s236, 0
        %s238 = scalar_select %p237, %s236, 0
        %s239 = smul.u32 2, %s238
        %s240 = sadd.s32 %s26, %s27
        %p241 = scmp.eq.s32.totalorder %s27, 0
        // Predicated region
        $region37: #{tpu_custom_call.1} parent=27 // pred_check
          %p242 = pneg %p241
        $region38: #{tpu_custom_call.1} parent=27 // pred_check_branch
          %244 = sbr.rel (%p242) target = $region40
        $region39: #{tpu_custom_call.1} parent=27 // pred_region
          %245 = vst [vmem:[%s231] sm:$0xff] 0.0
        $region40: #{tpu_custom_call.1} parent=27 // pred_fallthru
          _
        %p246 = scmp.lt.s32.totalorder %s240, 1
        // Predicated region
        $region41: #{tpu_custom_call.1} parent=27 // pred_check
          %p247 = pneg %p246
        $region42: #{tpu_custom_call.1} parent=27 // pred_check_branch
          %249 = sbr.rel (%p247) target = $region44
        $region43: #{tpu_custom_call.1} parent=27 // pred_region
          %v250 = vld [vmem:[%s231] sm:$0xff]
          %v251 = vld [vmem:[%s197] sm:$0xff]
          %v252 = vld [vmem:[%s197 + $0x8] sm:$0xff]
          %v253 = vld [vmem:[%s206] sm:$0xff]
          %v254 = vld [vmem:[%s206 + $0x8] sm:$0xff]
          %v255 = vlog2.pop %v251
          %v256 = vmul.f32 %v255, 0.6931472
          %v257 = vlog2.pop %v252
          %v258 = vmul.f32 %v257, 0.6931472
          %v259 = vmax.f32 %v256, -100.0
          %v260 = vmax.f32 %v258, -100.0
          %v261 = vsub.f32 1.0, %v251
          %v262 = vsub.f32 1.0, %v252
          %v263 = vlog2.pop %v261
          %v264 = vmul.f32 %v263, 0.6931472
          %v265 = vlog2.pop %v262
          %v266 = vmul.f32 %v265, 0.6931472
          %v267 = vmax.f32 %v264, -100.0
          %v268 = vmax.f32 %v266, -100.0
          %v269 = vmul.f32 %v253, %v259
          %v270 = vmul.f32 %v254, %v260
          %v271 = vsub.f32 1.0, %v253
          %v272 = vsub.f32 1.0, %v254
          %v273 = vmul.f32 %v271, %v267
          %v274 = vmul.f32 %v272, %v268
          %v275 = vadd.f32 %v269, %v273
          %v276 = vadd.f32 %v270, %v274
          %v277 = vsub.f32 0.0, %v275
          %v278 = vsub.f32 0.0, %v276
          %v279 = vadd.f32 %v277, %v278
          %v280 = vadd.f32 %v250, %v279
          %281 = vst [vmem:[%s231] sm:$0xff] %v280
        $region44: #{tpu_custom_call.1} parent=27 // pred_fallthru
          _
        %s282 = sand.u32 %s106, 1
        %s283 = scalar_lea.sflag [#allocation4], %s282
        %s284 = sand.u32 %s106, 1
        %s285 = smul.addr %s284, 8
        %s286 = scalar_lea.vmem [#allocation7], %s285
        // Predicated region
        $region45: #{tpu_custom_call.1} parent=27 // pred_check
          %p287 = pneg %p116
        $region46: #{tpu_custom_call.1} parent=27 // pred_check_branch
          %289 = sbr.rel (%p287) target = $region48
        $region47: #{tpu_custom_call.1} parent=27 // pred_region
          %s291 = ssub.s32 128, 128
          %292 = vsyncadd %s283, %s291
          %s293 = smul.addr %s26, 128
          %s294 = scalar_lea.hbm %s2, %s293
          %s296 = sshll.u32 %s286, 4
          %s297 = int_to_ptr.vmem [resolvable:$true] %s296
          %299 = dma.vmem_to_hbm [thread:$0]  %s297, 128, %s294, %s283
        $region48: #{tpu_custom_call.1} parent=27 // pred_fallthru
          _
      $region28: #{tpu_custom_call.1} parent=5 // pred_fallthru
        _
      %p300 = scmp.le.s32.totalorder 2, %s17
      // Predicated region
      $region49: #{tpu_custom_call.1} parent=5 // pred_check
        %p301 = pneg %p300
      $region50: #{tpu_custom_call.1} parent=5 // pred_check_branch
        %303 = sbr.rel (%p301) target = $region52
      $region51: #{tpu_custom_call.1} parent=5 // pred_region
        %s304 = ssub.s32 %s17, 2
        // Predicated region
        $region53: #{tpu_custom_call.1} parent=51 // pred_check
          %p305 = pneg %p122
        $region54: #{tpu_custom_call.1} parent=51 // pred_check_branch
          %307 = sbr.rel (%p305) target = $region56
        $region55: #{tpu_custom_call.1} parent=51 // pred_region
          %s308 = sand.u32 %s107, 1
          %s309 = scalar_lea.sflag [#allocation4], %s308
          %s310 = sand.u32 %s107, 1
          %s311 = smul.addr %s310, 8
          %s312 = scalar_lea.vmem [#allocation7], %s311
          %313 = dma.done %s309, 128
        $region56: #{tpu_custom_call.1} parent=51 // pred_fallthru
          _
      $region52: #{tpu_custom_call.1} parent=5 // pred_fallthru
        _
    $region6: #{tpu_custom_call.1} parent=1 // loop_footer
      %s21 = sadd.s32 1, %s17
    $region7: #{tpu_custom_call.1} parent=1 // loop_footer_branch
      %16 = sbr.rel target = $region3
    $region8: #{tpu_custom_call.1} parent=1 // loop_exit
      _
    %314 = vsyncpa [#allocation3], 1
    %s315 = scalar_lea.sflag [#allocation3], 1
    %316 = vsyncpa %s315, 1
    %317 = vsyncpa [#allocation6], 1
    %s318 = scalar_lea.sflag [#allocation6], 1
    %319 = vsyncpa %s318, 1
    %320 = vsyncpa [#allocation4], 1
    %s321 = scalar_lea.sflag [#allocation4], 1
    %322 = vsyncpa %s321, 1

</llo_original>
